<compile_context>
chip_gen: v5e
topology: v5e:2x2
jax: 0.10.0
libtpu: 0.0.40
codegen_flags: <defaults>
</compile_context>

<pallas_src>
import functools

import jax
import jax.numpy as jnp
from jax.experimental import pallas as pl
from jax.experimental.pallas import tpu as pltpu


def _postprocess_kernel(pose_ref, traj_ref, out_ref, *, tb):
    # pose_ref: [rows, 4] resident pose table (rows >= grid*tb, same block
    #           every step so it is DMA'd exactly once).
    # traj_ref / out_ref: [tb, n], n = K*L*2, interleaved [x0,y0,x1,y1,...].
    n = traj_ref.shape[-1]

    # Per-row pose for this tile.
    if pose_ref.shape[0] == tb:          # single-block case (tiny batch)
        pose = pose_ref[...].astype(jnp.float32)
    else:
        start = pl.program_id(0) * tb
        if tb % 8 == 0:
            start = pl.multiple_of(start, 8)
        pose = pose_ref[pl.ds(start, tb), :].astype(jnp.float32)
    px, py = pose[:, 0:1], pose[:, 1:2]          # [tb, 1] broadcast over lanes
    c, s = pose[:, 2:3], pose[:, 3:4]

    v = traj_ref[...].astype(jnp.float32)        # [tb, n]

    # Lane parity at single-row granularity (broadcasts over sublanes).
    lane = jax.lax.broadcasted_iota(jnp.int32, (1, n), 1)
    is_x = (lane & 1) == 0                       # even lanes hold x, odd hold y

    # Pair partner via two XLU lane rotations (jnp.roll semantics):
    #   roll(v, 1)[i]   = v[i-1]  -> x of the pair, needed on y lanes
    #   roll(v, n-1)[i] = v[i+1]  -> y of the pair, needed on x lanes
    # The wrap-around values (lane 0 / lane n-1) are never selected because
    # n is even, so pair boundaries never cross the wrap.
    a = pltpu.roll(v, 1, axis=1)
    b = pltpu.roll(v, n - 1, axis=1)
    partner = jnp.where(is_x, b, a)

    # Rigid transform:  x' = c*x - s*y + px ;  y' = c*y + s*x + py
    t = s * partner
    out = c * v + jnp.where(is_x, px - t, py + t)
    out_ref[...] = out.astype(out_ref.dtype)


def _choose_tb(batch: int, n_lanes: int) -> int:
    """Rows folded per grid step.

    Prefer a multiple of 8 (dense sublanes) dividing B with ~2 MiB of f32
    payload per tile per array, and enough grid steps (>=4 when B allows,
    i.e. >=2 per TensorCore on v7x) so the double-buffered pipeline overlaps.
    Tiny / indivisible batches fall back to a single full-batch block; large
    indivisible batches use a ragged (cdiv) grid with a masked tail block.
    """
    row_bytes = 4 * n_lanes                       # f32 compute path
    cap_rows = (2 << 20) // max(row_bytes, 1)     # ~2 MiB per block
    cap_rows = max(8, (cap_rows // 8) * 8)
    divs = [tb for tb in range(8, min(batch, cap_rows) + 1, 8) if batch % tb == 0]
    if divs:
        for min_steps in (4, 2, 1):
            ok = [tb for tb in divs if batch // tb >= min_steps]
            if ok:
                return max(ok)
    if batch <= cap_rows:
        return batch                              # one full-batch block
    return cap_rows                               # ragged grid, masked tail


def postprocess(pred_traj: jax.Array, agent_pose: jax.Array) -> jax.Array:
    """pred_traj: [B, K, L, 2], agent_pose: [B, 4] -> [B, K, L, 2]."""
    B, K, L, two = pred_traj.shape
    assert two == 2
    assert agent_pose.shape == (B, 4)
    n = K * L * 2
    # NOTE: n % 128 == 0 gives fully unmasked lane-dense stores; other n still
    # work (masked tail vreg), the rolls operate on the full flat axis.

    flat = pred_traj.reshape(B, n)                # contiguous view — no copy
    tb = _choose_tb(B, n)
    grid_len = -(-B // tb)                        # cdiv
    rows = grid_len * tb

    pose = agent_pose
    if rows != B:                                 # pad pose so the in-kernel
        pose = jnp.concatenate(                   # slice never reads OOB
            [agent_pose, jnp.zeros((rows - B, 4), agent_pose.dtype)], axis=0)

    # VMEM budget: 2x double-buffered IO blocks + in-kernel f32 temporaries,
    # raised above v5e's 16 MiB default, capped for v7x's 64 MiB physical VMEM.
    itemsize = jnp.dtype(pred_traj.dtype).itemsize
    need = 4 * tb * n * itemsize + 6 * tb * n * 4 + (1 << 20)
    vmem_limit = int(min(48 << 20, max(32 << 20, need)))

    out_flat = pl.pallas_call(
        functools.partial(_postprocess_kernel, tb=tb),
        out_shape=jax.ShapeDtypeStruct((B, n), pred_traj.dtype),
        grid_spec=pltpu.PrefetchScalarGridSpec(
            num_scalar_prefetch=0,
            grid=(grid_len,),
            in_specs=[
                # Pose: same block index every step => DMA'd once, VMEM-resident.
                pl.BlockSpec((rows, 4), lambda i: (0, 0)),
                # Trajectory rows: lane-dense (tb, K*L*2) tiles.
                pl.BlockSpec((tb, n), lambda i: (i, 0)),
            ],
            out_specs=pl.BlockSpec((tb, n), lambda i: (i, 0)),
        ),
        compiler_params=pltpu.CompilerParams(
            dimension_semantics=("parallel",),
            vmem_limit_bytes=vmem_limit,
        ),
    )(pose, flat)

    return out_flat.reshape(B, K, L, 2)           # contiguous view — no copy


def _reference(pred_traj, agent_pose):
    px = agent_pose[:, 0][:, None, None]
    py = agent_pose[:, 1][:, None, None]
    c = agent_pose[:, 2][:, None, None]
    s = agent_pose[:, 3][:, None, None]
    x = pred_traj[..., 0]
    y = pred_traj[..., 1]
    xw = c * x - s * y + px
    yw = s * x + c * y + py
    return jnp.stack([xw, yw], axis=-1)


if __name__ == "__main__":
    key = jax.random.PRNGKey(0)
    k1, k2, k3 = jax.random.split(key, 3)

    B, K, L = 2, 4, 16  # batch, candidate trajectories, trajectory length
    pred_traj = jax.random.normal(k1, (B, K, L, 2), dtype=jnp.float32)

    # Deterministic agent poses: position + unit heading vector (cos, sin).
    pos = jax.random.normal(k2, (B, 2), dtype=jnp.float32) * 10.0
    yaw = jax.random.uniform(k3, (B,), dtype=jnp.float32, minval=-3.14, maxval=3.14)
    agent_pose = jnp.concatenate(
        [pos, jnp.cos(yaw)[:, None], jnp.sin(yaw)[:, None]], axis=-1
    )  # [B, 4]

    out = jax.block_until_ready(postprocess(pred_traj, agent_pose))

    ref = _reference(pred_traj, agent_pose)
    assert out.shape == (B, K, L, 2)
    assert jnp.allclose(out, ref, atol=1e-5, rtol=1e-5)

    print("KERNEL_OK")
</pallas_src>

<mosaic_0001>
module attributes {stable_mosaic.version = 11 : i64} {
  func.func @_postprocess_kernel(%arg0: i32, %arg1: memref<2x4xf32, #tpu.memory_space<vmem>>, %arg2: memref<2x128xf32, #tpu.memory_space<vmem>>, %arg3: memref<2x128xf32, #tpu.memory_space<vmem>>) attributes {dimension_semantics = [#tpu.dimension_semantics<parallel>], iteration_bounds = array<i64: 1>, scalar_prefetch = 0 : i64, scratch_operands = 0 : i64, tpu.core_type = #tpu.core_type<tc>, window_params = [{pipeline_mode = #tpu.pipeline_mode<synchronous>, transform_indices = @transform_0, window_bounds = array<i64: 2, 4>}, {transform_indices = @transform_1, window_bounds = array<i64: 2, 128>}, {transform_indices = @transform_2, window_bounds = array<i64: 2, 128>}]} {
    %c0 = arith.constant 0 : index
    %c0_0 = arith.constant 0 : index
    %0 = vector.load %arg1[%c0, %c0_0] : memref<2x4xf32, #tpu.memory_space<vmem>>, vector<2x4xf32>
    %1 = vector.extract_strided_slice %0 {offsets = [0, 0], sizes = [2, 1], strides = [1, 1]} : vector<2x4xf32> to vector<2x1xf32>
    %2 = vector.extract_strided_slice %0 {offsets = [0, 1], sizes = [2, 1], strides = [1, 1]} : vector<2x4xf32> to vector<2x1xf32>
    %3 = vector.extract_strided_slice %0 {offsets = [0, 2], sizes = [2, 1], strides = [1, 1]} : vector<2x4xf32> to vector<2x1xf32>
    %4 = vector.extract_strided_slice %0 {offsets = [0, 3], sizes = [2, 1], strides = [1, 1]} : vector<2x4xf32> to vector<2x1xf32>
    %c0_1 = arith.constant 0 : index
    %c0_2 = arith.constant 0 : index
    %5 = vector.load %arg2[%c0_1, %c0_2] : memref<2x128xf32, #tpu.memory_space<vmem>>, vector<2x128xf32>
    %6 = tpu.iota {dimensions = array<i32: 1>} : vector<1x128xi32>
    %c1_i32 = arith.constant 1 : i32
    %7 = vector.broadcast %c1_i32 : i32 to vector<1x128xi32>
    %8 = arith.andi %6, %7 : vector<1x128xi32>
    %c0_i32 = arith.constant 0 : i32
    %9 = vector.broadcast %c0_i32 : i32 to vector<1x128xi32>
    %10 = arith.cmpi eq, %8, %9 : vector<1x128xi32>
    %c1_i32_3 = arith.constant 1 : i32
    %11 = tpu.dynamic_rotate %5 by %c1_i32_3 dim 1 : vector<2x128xf32>, i32 -> vector<2x128xf32>
    %c127_i32 = arith.constant 127 : i32
    %12 = tpu.dynamic_rotate %5 by %c127_i32 dim 1 : vector<2x128xf32>, i32 -> vector<2x128xf32>
    %13 = vector.shape_cast %10 : vector<1x128xi1> to vector<1x128xi1>
    %14 = vector.broadcast %13 : vector<1x128xi1> to vector<2x128xi1>
    %15 = arith.select %14, %12, %11 : vector<2x128xi1>, vector<2x128xf32>
    %16 = vector.broadcast %4 : vector<2x1xf32> to vector<2x128xf32>
    %17 = arith.mulf %16, %15 : vector<2x128xf32>
    %18 = vector.broadcast %3 : vector<2x1xf32> to vector<2x128xf32>
    %19 = arith.mulf %18, %5 : vector<2x128xf32>
    %20 = vector.broadcast %1 : vector<2x1xf32> to vector<2x128xf32>
    %21 = arith.subf %20, %17 : vector<2x128xf32>
    %22 = vector.broadcast %2 : vector<2x1xf32> to vector<2x128xf32>
    %23 = arith.addf %22, %17 : vector<2x128xf32>
    %24 = vector.shape_cast %10 : vector<1x128xi1> to vector<1x128xi1>
    %25 = vector.broadcast %24 : vector<1x128xi1> to vector<2x128xi1>
    %26 = arith.select %25, %21, %23 : vector<2x128xi1>, vector<2x128xf32>
    %27 = arith.addf %19, %26 : vector<2x128xf32>
    %c0_4 = arith.constant 0 : index
    %c0_5 = arith.constant 0 : index
    %28 = vector.load %arg3[%c0_4, %c0_5] : memref<2x128xf32, #tpu.memory_space<vmem>>, vector<2x128xf32>
    tpu.vector_store %arg3[%c0_4, %c0_5], %27 {strides = array<i32>} : memref<2x128xf32, #tpu.memory_space<vmem>>, vector<2x128xf32>,
    return
  }
  func.func @transform_0(%arg0: i32) -> (i32, i32) {
    %c0_i32 = arith.constant 0 : i32
    %c0_i32_0 = arith.constant 0 : i32
    %c0_i32_1 = arith.constant 0 : i32
    return %c0_i32, %c0_i32_0 : i32, i32
  }
  func.func @transform_1(%arg0: i32) -> (i32, i32) {
    %c0_i32 = arith.constant 0 : i32
    %c0_i32_0 = arith.constant 0 : i32
    return %arg0, %c0_i32 : i32, i32
  }
  func.func @transform_2(%arg0: i32) -> (i32, i32) {
    %c0_i32 = arith.constant 0 : i32
    %c0_i32_0 = arith.constant 0 : i32
    return %arg0, %c0_i32 : i32, i32
  }
}

</mosaic_0001>

<llo_original>
// kernel: tpu_custom_call.1
$region0: #{tpu_custom_call.1}
  #allocation0 [shape = 'u32[]', space=smem, size = 0x4, offset = 0x4, fixed_abs, tag = 'smem constant byte address 0x4 - core index']
  #allocation1 [shape = 'u32[72,128]{1,0:T(1,128)}', space=vmem, size = 0x9000, scoped, tag = 'internal scratch']
  %s0 = inlined_call_operand.hbm [shape: f32[2,4], index: 0, kind: input, shape index: {}]
  %s1 = inlined_call_operand.hbm [shape: f32[2,128], index: 1, kind: input, shape index: {}]
  %s2 = inlined_call_operand.hbm [shape: f32[2,128], index: 2, kind: output, shape index: {}]
  %s3 = sld [smem:[#allocation0]]
  $region26: #{tpu_custom_call.1} parent=0
    _
  %s5 = ssub.s32 1, %s3
  %s6 = scalar_select 0, %s5, %s3
  $region1: #{tpu_custom_call.1} parent=0
    #allocation2 [shape = 'u8[1024]{0}', space=vmem, size = 0x400, scoped, tag = 'input window, operand 0, single buffered']
    #allocation3 [shape = 's32[1]{0}', space=sflag, size = 0x4, scoped, tag = 'scoped memory for tpu_custom_call.1']
    #allocation4 [shape = 's32[1]{0}', space=sflag, size = 0x4, scoped, tag = 'scoped memory for tpu_custom_call.1']
    #allocation5 [shape = 'u8[1024]{0}', space=vmem, size = 0x400, scoped, tag = 'input window, operand 1, single buffered']
    #allocation6 [shape = 's32[1]{0}', space=sflag, size = 0x4, scoped, tag = 'scoped memory for tpu_custom_call.1']
    #allocation7 [shape = 'u8[1024]{0}', space=vmem, size = 0x400, scoped, tag = 'output window, operand 0, single buffered']
    %7 = vsyncpa [#allocation3], 0
    %8 = vsyncpa [#allocation6], 0
    %9 = vsyncpa [#allocation4], 0
    // Predicated region
    $region2: #{tpu_custom_call.1} parent=1 // pred_check
      _
    $region3: #{tpu_custom_call.1} parent=1 // pred_check_branch
      %11 = sbr.rel (0) target = $region5
    $region4: #{tpu_custom_call.1} parent=1 // pred_region
      %13 = vsyncadd [#allocation3], 0
      %s15 = sshll.u32 %s0, 4
      %s16 = int_to_ptr.hbm [resolvable:$true] %s15
      %s17 = sshll.u32 [#allocation2], 4
      %s18 = int_to_ptr.vmem [resolvable:$true] %s17
      %20 = dma.hbm_to_vmem [thread:$0]  %s16, 32, %s18, [#allocation3]
    $region5: #{tpu_custom_call.1} parent=1 // pred_fallthru
      _
    // Predicated region
    $region6: #{tpu_custom_call.1} parent=1 // pred_check
      _
    $region7: #{tpu_custom_call.1} parent=1 // pred_check_branch
      %22 = sbr.rel (0) target = $region9
    $region8: #{tpu_custom_call.1} parent=1 // pred_region
      %24 = vsyncadd [#allocation6], 0
      %s26 = sshll.u32 %s1, 4
      %s27 = int_to_ptr.hbm [resolvable:$true] %s26
      %s28 = sshll.u32 [#allocation5], 4
      %s29 = int_to_ptr.vmem [resolvable:$true] %s28
      %31 = dma.hbm_to_vmem [thread:$0]  %s27, 32, %s29, [#allocation6]
    $region9: #{tpu_custom_call.1} parent=1 // pred_fallthru
      _
    // Predicated region
    $region10: #{tpu_custom_call.1} parent=1 // pred_check
      _
    $region11: #{tpu_custom_call.1} parent=1 // pred_check_branch
      %33 = sbr.rel (0) target = $region13
    $region12: #{tpu_custom_call.1} parent=1 // pred_region
      %35 = dma.done [#allocation3], 32
    $region13: #{tpu_custom_call.1} parent=1 // pred_fallthru
      _
    // Predicated region
    $region14: #{tpu_custom_call.1} parent=1 // pred_check
      _
    $region15: #{tpu_custom_call.1} parent=1 // pred_check_branch
      %37 = sbr.rel (0) target = $region17
    $region16: #{tpu_custom_call.1} parent=1 // pred_region
      %39 = dma.done [#allocation6], 32
    $region17: #{tpu_custom_call.1} parent=1 // pred_fallthru
      _
    %v40 = vld [vmem:[#allocation2] sm:$0x3]
    %v41 = vld [vmem:[#allocation5] sm:$0x3]
    %v42 = vlaneseq
    %v43 = vand.u32 %v42, 127
    %v44 = vand.u32 %v43, 1
    %vm45 = vcmp.eq.s32.totalorder %v44, 0
    %46 = vrot.lane.b32.xlu0 %v41, 1
    %v47 = vpop.permute.xlu0 %46
    %48 = vrot.lane.b32.xlu0 %v41, 127
    %v49 = vpop.permute.xlu0 %48
    %v50 = vsel %vm45, 1, 0
    %vm51 = vcmp.eq.s32.totalorder %v50, 1
    %v52 = vsel %vm51, %v49, %v47
    %54 = vset.pattern.permute.xlu0 3
    %55 = vperm.xlu0 %54, %v40
    %v56 = vpop.permute.xlu0 %55
    %v58 = vmul.f32 %v56, %v52
    %59 = vset.pattern.permute.xlu0 2
    %60 = vperm.xlu0 %59, %v40
    %v61 = vpop.permute.xlu0 %60
    %v63 = vmul.f32 %v61, %v41
    %64 = vset.pattern.permute.xlu0 0
    %65 = vperm.xlu0 %64, %v40
    %v66 = vpop.permute.xlu0 %65
    %v68 = vsub.f32 %v66, %v58
    %69 = vset.pattern.permute.xlu0 1
    %70 = vperm.xlu0 %69, %v40
    %v71 = vpop.permute.xlu0 %70
    %v73 = vadd.f32 %v71, %v58
    %v74 = vsel %vm51, %v68, %v73
    %v75 = vadd.f32 %v63, %v74
    %76 = vst [vmem:[#allocation7] sm:$0x3] %v75
    // Predicated region
    $region18: #{tpu_custom_call.1} parent=1 // pred_check
      _
    $region19: #{tpu_custom_call.1} parent=1 // pred_check_branch
      %78 = sbr.rel (0) target = $region21
    $region20: #{tpu_custom_call.1} parent=1 // pred_region
      %80 = vsyncadd [#allocation4], 0
      %s82 = sshll.u32 [#allocation7], 4
      %s83 = int_to_ptr.vmem [resolvable:$true] %s82
      %s84 = sshll.u32 %s2, 4
      %s85 = int_to_ptr.hbm [resolvable:$true] %s84
      %87 = dma.vmem_to_hbm [thread:$0]  %s83, 32, %s85, [#allocation4]
    $region21: #{tpu_custom_call.1} parent=1 // pred_fallthru
      _
    // Predicated region
    $region22: #{tpu_custom_call.1} parent=1 // pred_check
      _
    $region23: #{tpu_custom_call.1} parent=1 // pred_check_branch
      %89 = sbr.rel (0) target = $region25
    $region24: #{tpu_custom_call.1} parent=1 // pred_region
      %91 = dma.done [#allocation4], 32
    $region25: #{tpu_custom_call.1} parent=1 // pred_fallthru
      _
    %92 = vsyncpa [#allocation3], 1
    %93 = vsyncpa [#allocation6], 1
    %94 = vsyncpa [#allocation4], 1

</llo_original>
